<compile_context>
chip_gen: v5e
topology: v5e:2x2
jax: 0.10.0
libtpu: 0.0.40
codegen_flags: <defaults>
</compile_context>

<pallas_src>
from functools import partial

import jax
import jax.numpy as jnp
from jax import lax
from jax.experimental import pallas as pl
from jax.experimental.pallas import tpu as pltpu


def _round_up(x, m):
    return ((x + m - 1) // m) * m


def _tversky_sums_kernel(yp_ref, yt_ref, out_ref, *, nt, tile, chunk, epsilon):
    """Accumulate per-row, per-class partial sums.

    Inputs: channel-interleaved, sublane-folded planes of shape (ROWS, CHUNK),
    tiled along the lane axis.  out_ref is the resident (ROWS, 6) accumulator
    with columns [tp0, sum_yt0, sum_yp0, tp1, sum_yt1, sum_yp1].
    """
    p = pl.program_id(0)          # parallel axis (megacore split of the tiles)
    k = pl.program_id(1)          # sequential reduction axis over lane tiles

    @pl.when(k == 0)
    def _init():
        out_ref[...] = jnp.zeros_like(out_ref)

    yp = yp_ref[...].astype(jnp.float32)
    yt = yt_ref[...].astype(jnp.float32)
    yp = jnp.clip(yp, epsilon, 1.0 - epsilon)

    # Mask lanes outside the real data (partial boundary tile / phantom tile).
    lane = lax.broadcasted_iota(jnp.int32, yp.shape, 1)
    t = p * nt + k                              # true (unclamped) tile index
    valid = (t * tile + lane) < chunk
    yp = jnp.where(valid, yp, 0.0)
    yt = jnp.where(valid, yt, 0.0)

    # Channels are interleaved along lanes: even lane -> class 0 (background),
    # odd lane -> class 1 (foreground).  (CHUNK and TILE are even.)
    is_fg = (lane & 1) == 1

    prod = yt * yp
    prod_f = jnp.where(is_fg, prod, 0.0)
    yt_f = jnp.where(is_fg, yt, 0.0)
    yp_f = jnp.where(is_fg, yp, 0.0)

    def rsum(x):
        return jnp.sum(x, axis=1, keepdims=True)          # (ROWS, 1)

    tp1 = rsum(prod_f)
    st1 = rsum(yt_f)
    sp1 = rsum(yp_f)
    tp0 = rsum(prod) - tp1          # even-lane sums via total - odd
    st0 = rsum(yt) - st1
    sp0 = rsum(yp) - sp1

    out_ref[...] += jnp.concatenate([tp0, st0, sp0, tp1, st1, sp1], axis=1)


def asymmetric_focal_tversky_loss(y_pred, y_true, *, delta=0.7, gamma=0.75,
                                  epsilon=1e-7, max_tile_lanes=16384):
    """y_pred, y_true: (B, H, W, 2) channels-last.  Returns the scalar loss."""
    B, H, W, C = y_pred.shape
    assert C == 2, "binary segmentation: channel dim must be 2"
    assert y_true.shape == y_pred.shape
    L = H * W
    two_l = 2 * L

    # Sublane folding: view each sample's interleaved (pixel, channel) stream
    # of length 2*L as SUB rows so vregs use all 8 sublanes even for tiny B.
    sub = 1
    for cand in (8, 4, 2):
        if L % cand == 0 and (two_l // cand) >= 128:
            sub = cand
            break
    rows = B * sub
    chunk = two_l // sub            # even -> every folded row starts on class 0

    # Free (layout-preserving) reshapes — no transpose / channel-split pass.
    yp = y_pred.reshape(rows, chunk)
    yt = y_true.reshape(rows, chunk)

    # Lane tiling: biggest tile that keeps each input block around ~1 MiB.
    itemsize = jnp.dtype(y_pred.dtype).itemsize
    tile_cap = max(512, ((1 << 20) // (rows * itemsize)) // 128 * 128)
    tile = min(max_tile_lanes, tile_cap, _round_up(chunk, 128))
    tile = max(128, (tile // 128) * 128)
    n_tiles = (chunk + tile - 1) // tile

    # Split tiles across the 2 TensorCores of v7x; harmless on 1-TC chips.
    n_par = 2 if n_tiles >= 2 else 1
    nt = (n_tiles + n_par - 1) // n_par
    last = n_tiles - 1

    def in_map(p, k):
        # Clamp so the (at most one) phantom tile re-reads an in-bounds block;
        # its lanes are fully masked inside the kernel.
        return (0, jnp.minimum(p * nt + k, last))

    kernel = partial(_tversky_sums_kernel, nt=nt, tile=tile, chunk=chunk,
                     epsilon=float(epsilon))

    block_bytes = rows * tile * itemsize
    vmem_limit = int(min(64 << 20, max(4 << 20, 8 * block_bytes)))

    partials = pl.pallas_call(
        kernel,
        out_shape=jax.ShapeDtypeStruct((n_par, rows, 6), jnp.float32),
        grid=(n_par, nt),
        in_specs=[pl.BlockSpec((rows, tile), in_map),
                  pl.BlockSpec((rows, tile), in_map)],
        out_specs=pl.BlockSpec((None, rows, 6), lambda p, k: (p, 0, 0)),
        compiler_params=pltpu.CompilerParams(
            dimension_semantics=("parallel", "arbitrary"),
            vmem_limit_bytes=vmem_limit),
    )(yp, yt)

    # Tiny O(B) epilogue in plain JAX: combine per-core / per-sublane partials
    # and apply the asymmetric focal Tversky formula.
    sums = partials.sum(axis=0).reshape(B, sub, 6).sum(axis=1)      # (B, 6)
    tp0, st0, sp0, tp1, st1, sp1 = (sums[:, i] for i in range(6))
    fn0, fp0 = st0 - tp0, sp0 - tp0        # fn = Σy_t - tp, fp = Σy_p - tp
    fn1, fp1 = st1 - tp1, sp1 - tp1
    dice0 = (tp0 + epsilon) / (tp0 + delta * fn0 + (1.0 - delta) * fp0 + epsilon)
    dice1 = (tp1 + epsilon) / (tp1 + delta * fn1 + (1.0 - delta) * fp1 + epsilon)
    back_dice = 1.0 - dice0
    # Literal PyTorch form; algebraically equals (1 - dice1)**(1 - gamma) for
    # dice1 < 1 (which clipping guarantees).
    fore_dice = (1.0 - dice1) * jnp.power(1.0 - dice1, -gamma)
    return jnp.mean(jnp.concatenate([back_dice, fore_dice]))


def _reference_loss(y_pred, y_true, delta=0.7, gamma=0.75, eps=1e-7):
    """Pure-JAX transcription of the PyTorch AsymmetricFocalTverskyLoss."""
    yp = jnp.clip(y_pred, eps, 1.0 - eps)
    tp = jnp.sum(y_true * yp, axis=(1, 2))
    fn = jnp.sum(y_true * (1.0 - yp), axis=(1, 2))
    fp = jnp.sum((1.0 - y_true) * yp, axis=(1, 2))
    dice = (tp + eps) / (tp + delta * fn + (1.0 - delta) * fp + eps)
    back = 1.0 - dice[:, 0]
    fore = (1.0 - dice[:, 1]) * jnp.power(1.0 - dice[:, 1], -gamma)
    return jnp.mean(jnp.stack([back, fore], axis=-1))


if __name__ == "__main__":
    key = jax.random.PRNGKey(0)
    cases = [
        ((2, 16, 16, 2), {}),                         # single-tile path
        ((2, 48, 64, 2), {}),                         # sublane-folded, one big tile
        ((2, 40, 64, 2), {"max_tile_lanes": 256}),    # multi-tile + 2-way parallel
    ]
    for i, (shape, kwargs) in enumerate(cases):
        k1, k2 = jax.random.split(jax.random.fold_in(key, i))
        logits = jax.random.normal(k1, shape, dtype=jnp.float32)
        y_pred = jax.nn.softmax(logits, axis=-1)              # probabilities
        labels = jax.random.randint(k2, shape[:-1], 0, 2)
        y_true = jax.nn.one_hot(labels, 2, dtype=jnp.float32)  # one-hot targets

        loss = jax.block_until_ready(
            asymmetric_focal_tversky_loss(y_pred, y_true, **kwargs))
        ref = jax.block_until_ready(_reference_loss(y_pred, y_true))
        assert jnp.allclose(loss, ref, rtol=2e-5, atol=1e-6), (shape, loss, ref)

    print("KERNEL_OK")
</pallas_src>

<mosaic_0001>
module attributes {stable_mosaic.version = 11 : i64} {
  func.func @_tversky_sums_kernel(%arg0: i32, %arg1: i32, %arg2: memref<8x128xf32, #tpu.memory_space<vmem>>, %arg3: memref<8x128xf32, #tpu.memory_space<vmem>>, %arg4: memref<1x8x6xf32, #tpu.memory_space<vmem>>) attributes {dimension_semantics = [#tpu.dimension_semantics<parallel>, #tpu.dimension_semantics<arbitrary>], iteration_bounds = array<i64: 1, 1>, scalar_prefetch = 0 : i64, scratch_operands = 0 : i64, tpu.core_type = #tpu.core_type<tc>, window_params = [{transform_indices = @transform_0, window_bounds = array<i64: 8, 128>}, {transform_indices = @transform_1, window_bounds = array<i64: 8, 128>}, {transform_indices = @transform_2, window_bounds = array<i64: 1, 8, 6>}]} {
    %c0_i32 = arith.constant 0 : i32
    %0 = arith.cmpi eq, %arg1, %c0_i32 : i32
    %1 = arith.extui %0 : i1 to i32
    %c0_i32_0 = arith.constant 0 : i32
    %2 = arith.cmpi ne, %1, %c0_i32_0 : i32
    scf.if %2 {
      %cst_25 = arith.constant 0.000000e+00 : f32
      %54 = vector.broadcast %cst_25 : f32 to vector<8x6xf32>
      %c0_26 = arith.constant 0 : index
      %c0_27 = arith.constant 0 : index
      %c0_28 = arith.constant 0 : index
      %55 = vector.load %arg4[%c0_26, %c0_27, %c0_28] : memref<1x8x6xf32, #tpu.memory_space<vmem>>, vector<1x8x6xf32>
      %56 = vector.shape_cast %55 : vector<1x8x6xf32> to vector<8x6xf32>
      %57 = vector.shape_cast %54 : vector<8x6xf32> to vector<1x8x6xf32>
      tpu.vector_store %arg4[%c0_26, %c0_27, %c0_28], %57 {strides = array<i32>} : memref<1x8x6xf32, #tpu.memory_space<vmem>>, vector<1x8x6xf32>,
    } else {
    }
    %c0 = arith.constant 0 : index
    %c0_1 = arith.constant 0 : index
    %3 = vector.load %arg2[%c0, %c0_1] : memref<8x128xf32, #tpu.memory_space<vmem>>, vector<8x128xf32>
    %c0_2 = arith.constant 0 : index
    %c0_3 = arith.constant 0 : index
    %4 = vector.load %arg3[%c0_2, %c0_3] : memref<8x128xf32, #tpu.memory_space<vmem>>, vector<8x128xf32>
    %cst = arith.constant 1.000000e-07 : f32
    %cst_4 = arith.constant 0.99999988 : f32
    %5 = vector.broadcast %cst : f32 to vector<8x128xf32>
    %6 = arith.maximumf %5, %3 : vector<8x128xf32>
    %7 = vector.broadcast %cst_4 : f32 to vector<8x128xf32>
    %8 = arith.minimumf %7, %6 : vector<8x128xf32>
    %9 = tpu.iota {dimensions = array<i32: 1>} : vector<8x128xi32>
    %c1_i32 = arith.constant 1 : i32
    %10 = arith.muli %arg0, %c1_i32 : i32
    %11 = arith.addi %10, %arg1 : i32
    %c128_i32 = arith.constant 128 : i32
    %12 = arith.muli %11, %c128_i32 : i32
    %13 = vector.broadcast %12 : i32 to vector<8x128xi32>
    %14 = arith.addi %13, %9 : vector<8x128xi32>
    %c128_i32_5 = arith.constant 128 : i32
    %15 = vector.broadcast %c128_i32_5 : i32 to vector<8x128xi32>
    %16 = arith.cmpi slt, %14, %15 : vector<8x128xi32>
    %cst_6 = arith.constant 0.000000e+00 : f32
    %17 = vector.broadcast %cst_6 : f32 to vector<8x128xf32>
    %18 = arith.select %16, %8, %17 : vector<8x128xi1>, vector<8x128xf32>
    %cst_7 = arith.constant 0.000000e+00 : f32
    %19 = vector.broadcast %cst_7 : f32 to vector<8x128xf32>
    %20 = arith.select %16, %4, %19 : vector<8x128xi1>, vector<8x128xf32>
    %c1_i32_8 = arith.constant 1 : i32
    %21 = vector.broadcast %c1_i32_8 : i32 to vector<8x128xi32>
    %22 = arith.andi %9, %21 : vector<8x128xi32>
    %c1_i32_9 = arith.constant 1 : i32
    %23 = vector.broadcast %c1_i32_9 : i32 to vector<8x128xi32>
    %24 = arith.cmpi eq, %22, %23 : vector<8x128xi32>
    %25 = arith.mulf %20, %18 : vector<8x128xf32>
    %cst_10 = arith.constant 0.000000e+00 : f32
    %26 = vector.broadcast %cst_10 : f32 to vector<8x128xf32>
    %27 = arith.select %24, %25, %26 : vector<8x128xi1>, vector<8x128xf32>
    %cst_11 = arith.constant 0.000000e+00 : f32
    %28 = vector.broadcast %cst_11 : f32 to vector<8x128xf32>
    %29 = arith.select %24, %20, %28 : vector<8x128xi1>, vector<8x128xf32>
    %cst_12 = arith.constant 0.000000e+00 : f32
    %30 = vector.broadcast %cst_12 : f32 to vector<8x128xf32>
    %31 = arith.select %24, %18, %30 : vector<8x128xi1>, vector<8x128xf32>
    %cst_13 = arith.constant dense<0.000000e+00> : vector<8xf32>
    %32 = vector.multi_reduction <add>, %27, %cst_13 [1] : vector<8x128xf32> to vector<8xf32>
    %33 = vector.shape_cast %32 : vector<8xf32> to vector<8x1xf32>
    %cst_14 = arith.constant dense<0.000000e+00> : vector<8xf32>
    %34 = vector.multi_reduction <add>, %29, %cst_14 [1] : vector<8x128xf32> to vector<8xf32>
    %35 = vector.shape_cast %34 : vector<8xf32> to vector<8x1xf32>
    %cst_15 = arith.constant dense<0.000000e+00> : vector<8xf32>
    %36 = vector.multi_reduction <add>, %31, %cst_15 [1] : vector<8x128xf32> to vector<8xf32>
    %37 = vector.shape_cast %36 : vector<8xf32> to vector<8x1xf32>
    %cst_16 = arith.constant dense<0.000000e+00> : vector<8xf32>
    %38 = vector.multi_reduction <add>, %25, %cst_16 [1] : vector<8x128xf32> to vector<8xf32>
    %39 = vector.shape_cast %38 : vector<8xf32> to vector<8x1xf32>
    %40 = arith.subf %39, %33 : vector<8x1xf32>
    %cst_17 = arith.constant dense<0.000000e+00> : vector<8xf32>
    %41 = vector.multi_reduction <add>, %20, %cst_17 [1] : vector<8x128xf32> to vector<8xf32>
    %42 = vector.shape_cast %41 : vector<8xf32> to vector<8x1xf32>
    %43 = arith.subf %42, %35 : vector<8x1xf32>
    %cst_18 = arith.constant dense<0.000000e+00> : vector<8xf32>
    %44 = vector.multi_reduction <add>, %18, %cst_18 [1] : vector<8x128xf32> to vector<8xf32>
    %45 = vector.shape_cast %44 : vector<8xf32> to vector<8x1xf32>
    %46 = arith.subf %45, %37 : vector<8x1xf32>
    %c0_19 = arith.constant 0 : index
    %c0_20 = arith.constant 0 : index
    %c0_21 = arith.constant 0 : index
    %47 = vector.load %arg4[%c0_19, %c0_20, %c0_21] : memref<1x8x6xf32, #tpu.memory_space<vmem>>, vector<1x8x6xf32>
    %48 = vector.shape_cast %47 : vector<1x8x6xf32> to vector<8x6xf32>
    %49 = tpu.concatenate %40, %43, %46, %33, %35, %37 in 1 : vector<8x1xf32>, vector<8x1xf32>, vector<8x1xf32>, vector<8x1xf32>, vector<8x1xf32>, vector<8x1xf32> -> vector<8x6xf32>
    %50 = arith.addf %48, %49 : vector<8x6xf32>
    %c0_22 = arith.constant 0 : index
    %c0_23 = arith.constant 0 : index
    %c0_24 = arith.constant 0 : index
    %51 = vector.load %arg4[%c0_22, %c0_23, %c0_24] : memref<1x8x6xf32, #tpu.memory_space<vmem>>, vector<1x8x6xf32>
    %52 = vector.shape_cast %51 : vector<1x8x6xf32> to vector<8x6xf32>
    %53 = vector.shape_cast %50 : vector<8x6xf32> to vector<1x8x6xf32>
    tpu.vector_store %arg4[%c0_22, %c0_23, %c0_24], %53 {strides = array<i32>} : memref<1x8x6xf32, #tpu.memory_space<vmem>>, vector<1x8x6xf32>,
    return
  }
  func.func @transform_0(%arg0: i32, %arg1: i32) -> (i32, i32) {
    %c1_i32 = arith.constant 1 : i32
    %0 = arith.muli %arg0, %c1_i32 : i32
    %1 = arith.addi %0, %arg1 : i32
    %c0_i32 = arith.constant 0 : i32
    %2 = arith.minsi %1, %c0_i32 : i32
    %c0_i32_0 = arith.constant 0 : i32
    %c0_i32_1 = arith.constant 0 : i32
    return %c0_i32_0, %2 : i32, i32
  }
  func.func @transform_1(%arg0: i32, %arg1: i32) -> (i32, i32) {
    %c1_i32 = arith.constant 1 : i32
    %0 = arith.muli %arg0, %c1_i32 : i32
    %1 = arith.addi %0, %arg1 : i32
    %c0_i32 = arith.constant 0 : i32
    %2 = arith.minsi %1, %c0_i32 : i32
    %c0_i32_0 = arith.constant 0 : i32
    %c0_i32_1 = arith.constant 0 : i32
    return %c0_i32_0, %2 : i32, i32
  }
  func.func @transform_2(%arg0: i32, %arg1: i32) -> (i32, i32, i32) {
    %c0_i32 = arith.constant 0 : i32
    %c0_i32_0 = arith.constant 0 : i32
    %c0_i32_1 = arith.constant 0 : i32
    return %arg0, %c0_i32, %c0_i32_0 : i32, i32, i32
  }
}

</mosaic_0001>

<llo_original>
// kernel: tpu_custom_call.1
$region0: #{tpu_custom_call.1}
  #allocation0 [shape = 'u32[]', space=smem, size = 0x4, offset = 0x4, fixed_abs, tag = 'smem constant byte address 0x4 - core index']
  #allocation1 [shape = 'u32[72,128]{1,0:T(1,128)}', space=vmem, size = 0x9000, scoped, tag = 'internal scratch']
  %s0 = inlined_call_operand.hbm [shape: f32[8,128], index: 0, kind: input, shape index: {}]
  %s1 = inlined_call_operand.hbm [shape: f32[8,128], index: 1, kind: input, shape index: {}]
  %s2 = inlined_call_operand.vmem [shape: f32[1,8,6], index: 2, kind: output, shape index: {}]
  %s3 = sld [smem:[#allocation0]]
  $region30: #{tpu_custom_call.1} parent=0
    _
  %s5 = ssub.s32 1, %s3
  %s6 = scalar_select 0, %s5, %s3
  $region1: #{tpu_custom_call.1} parent=0
    #allocation2 [shape = 'u8[4096]{0}', space=vmem, size = 0x1000, scoped, tag = 'input window, operand 0, single buffered']
    #allocation3 [shape = 's32[1]{0}', space=sflag, size = 0x4, scoped, tag = 'scoped memory for tpu_custom_call.1']
    #allocation4 [shape = 'u8[4096]{0}', space=vmem, size = 0x1000, scoped, tag = 'input window, operand 1, single buffered']
    #allocation5 [shape = 's32[1]{0}', space=sflag, size = 0x4, scoped, tag = 'scoped memory for tpu_custom_call.1']
    %7 = vsyncpa [#allocation3], 0
    %8 = vsyncpa [#allocation5], 0
    // Predicated region
    $region2: #{tpu_custom_call.1} parent=1 // pred_check
      _
    $region3: #{tpu_custom_call.1} parent=1 // pred_check_branch
      %10 = sbr.rel (0) target = $region5
    $region4: #{tpu_custom_call.1} parent=1 // pred_region
      %s11 = sadd.s32 0, 0
      %p12 = scmp.lt.s32.totalorder %s11, 0
      %s13 = scalar_select %p12, %s11, 0
      %15 = vsyncadd [#allocation3], 0
      %s16 = smul.addr %s13, 8
      %s17 = scalar_lea.hbm %s0, %s16
      %s19 = sshll.u32 %s17, 4
      %s20 = int_to_ptr.hbm [resolvable:$true] %s19
      %s21 = sshll.u32 [#allocation2], 4
      %s22 = int_to_ptr.vmem [resolvable:$true] %s21
      %24 = dma.hbm_to_vmem [thread:$0]  %s20, 128, %s22, [#allocation3]
    $region5: #{tpu_custom_call.1} parent=1 // pred_fallthru
      _
    // Predicated region
    $region6: #{tpu_custom_call.1} parent=1 // pred_check
      _
    $region7: #{tpu_custom_call.1} parent=1 // pred_check_branch
      %26 = sbr.rel (0) target = $region9
    $region8: #{tpu_custom_call.1} parent=1 // pred_region
      %s27 = sadd.s32 0, 0
      %p28 = scmp.lt.s32.totalorder %s27, 0
      %s29 = scalar_select %p28, %s27, 0
      %31 = vsyncadd [#allocation5], 0
      %s32 = smul.addr %s29, 8
      %s33 = scalar_lea.hbm %s1, %s32
      %s35 = sshll.u32 %s33, 4
      %s36 = int_to_ptr.hbm [resolvable:$true] %s35
      %s37 = sshll.u32 [#allocation4], 4
      %s38 = int_to_ptr.vmem [resolvable:$true] %s37
      %40 = dma.hbm_to_vmem [thread:$0]  %s36, 128, %s38, [#allocation5]
    $region9: #{tpu_custom_call.1} parent=1 // pred_fallthru
      _
    // Predicated region
    $region10: #{tpu_custom_call.1} parent=1 // pred_check
      _
    $region11: #{tpu_custom_call.1} parent=1 // pred_check_branch
      %42 = sbr.rel (0) target = $region13
    $region12: #{tpu_custom_call.1} parent=1 // pred_region
      %44 = dma.done [#allocation3], 128
    $region13: #{tpu_custom_call.1} parent=1 // pred_fallthru
      _
    // Predicated region
    $region14: #{tpu_custom_call.1} parent=1 // pred_check
      _
    $region15: #{tpu_custom_call.1} parent=1 // pred_check_branch
      %46 = sbr.rel (0) target = $region17
    $region16: #{tpu_custom_call.1} parent=1 // pred_region
      %48 = dma.done [#allocation5], 128
    $region17: #{tpu_custom_call.1} parent=1 // pred_fallthru
      _
    %s49 = sadd.s32 0, 0
    %p50 = scmp.lt.s32.totalorder %s49, 0
    %s51 = scalar_select %p50, %s49, 0
    %s52 = sadd.s32 0, 0
    %p53 = scmp.lt.s32.totalorder %s52, 0
    %s54 = scalar_select %p53, %s52, 0
    %p55 = scmp.eq.s32.totalorder 0, 0
    // Predicated region
    $region18: #{tpu_custom_call.1} parent=1 // pred_check
      %p56 = pneg %p55
    $region19: #{tpu_custom_call.1} parent=1 // pred_check_branch
      %58 = sbr.rel (%p56) target = $region21
    $region20: #{tpu_custom_call.1} parent=1 // pred_region
      %vm59 = vcmask 48128
      %60 = vst.msk [vmem:[%s2] sm:$0xff] %vm59, 0.0
    $region21: #{tpu_custom_call.1} parent=1 // pred_fallthru
      _
    %v61 = vld [vmem:[#allocation2] sm:$0xff]
    %v62 = vld [vmem:[#allocation4] sm:$0xff]
    %v63 = vmax.f32 %v61, 1e-07
    %v64 = vmin.f32 %v63, 0.9999999
    %v65 = vlaneseq
    %v66 = vand.u32 %v65, 127
    %s67 = sadd.s32 0, 0
    %s68 = smul.u32 %s67, 128
    %v69 = vstv %s68
    %v70 = vadd.s32 %v69, %v66
    %vm71 = vcmp.lt.s32.totalorder %v70, 128
    %v72 = vsel %vm71, %v64, 0.0
    %v73 = vsel %vm71, %v62, 0.0
    %v74 = vand.u32 %v66, 1
    %vm75 = vcmp.eq.s32.totalorder %v74, 1
    %v76 = vmul.f32 %v73, %v72
    %v77 = vsel %vm75, %v76, 0.0
    %v78 = vsel %vm75, %v73, 0.0
    %v79 = vsel %vm75, %v72, 0.0
    %80 = vadd.xlane.f32.xlu0 %v77
    %v81 = vpop.xlane.xlu0 %80
    %82 = vadd.xlane.f32.xlu0 %v78
    %v83 = vpop.xlane.xlu0 %82
    %84 = vadd.xlane.f32.xlu0 %v79
    %v85 = vpop.xlane.xlu0 %84
    %86 = vadd.xlane.f32.xlu0 %v76
    %v87 = vpop.xlane.xlu0 %86
    %v88 = vsub.f32 %v87, %v81
    %89 = vadd.xlane.f32.xlu0 %v73
    %v90 = vpop.xlane.xlu0 %89
    %v91 = vsub.f32 %v90, %v83
    %92 = vadd.xlane.f32.xlu0 %v72
    %v93 = vpop.xlane.xlu0 %92
    %v94 = vsub.f32 %v93, %v85
    %v95 = vld [vmem:[%s2] sm:$0xff]
    %vm96 = vcmask 7168
    %v97 = vsel %vm96, %v88, %v91
    %vm98 = vcmask 15360
    %v99 = vsel %vm98, %v97, %v94
    %vm100 = vcmask 23552
    %v101 = vsel %vm100, %v99, %v81
    %vm102 = vcmask 31744
    %v103 = vsel %vm102, %v101, %v83
    %vm104 = vcmask 39936
    %v105 = vsel %vm104, %v103, %v85
    %v106 = vadd.f32 %v95, %v105
    %vm107 = vcmask 48128
    %108 = vst.msk [vmem:[%s2] sm:$0xff] %vm107, %v106
    // Predicated region
    $region22: #{tpu_custom_call.1} parent=1 // pred_check
      _
    $region23: #{tpu_custom_call.1} parent=1 // pred_check_branch
      %110 = sbr.rel (0) target = $region25
    $region24: #{tpu_custom_call.1} parent=1 // pred_region
      _
    $region25: #{tpu_custom_call.1} parent=1 // pred_fallthru
      _
    // Predicated region
    $region26: #{tpu_custom_call.1} parent=1 // pred_check
      _
    $region27: #{tpu_custom_call.1} parent=1 // pred_check_branch
      %112 = sbr.rel (0) target = $region29
    $region28: #{tpu_custom_call.1} parent=1 // pred_region
      _
    $region29: #{tpu_custom_call.1} parent=1 // pred_fallthru
      _
    %113 = vsyncpa [#allocation3], 1
    %114 = vsyncpa [#allocation5], 1

</llo_original>
